<compile_context>
chip_gen: v6e
topology: v6e:2x2x1
jax: 0.10.0
libtpu: 0.0.40
codegen_flags: <defaults>
</compile_context>

<pallas_src>
import functools

import jax
import jax.numpy as jnp
import numpy as np
from jax.experimental import pallas as pl
from jax.experimental.pallas import tpu as pltpu

# ----------------------------- configuration ------------------------------
NUM_COMPRESS_TOKEN = 2       # num_compress_token
HIDDEN = 128                 # model hidden size
VOCAB = 64                   # model vocab size (last K ids are <EMBEDi> tokens)
SEQ = 16                     # input sequence length (before appending embed tokens)
PAD_TOKEN_ID = 0
NORMALIZED = False           # AutoRegEmbed(normalized=False) default
SIM_METHOD = "cos"           # 'cos' | 'dot'
TEMPERATURE = 1.0
USE_INBATCH_NEG = True       # default; training branch with in-batch negatives

# MXU operand dtype for the similarity matmul (accumulation stays f32) and the
# dtype of the scores writeback (the binding HBM stream at production sizes).
MATMUL_INPUT_DTYPE = jnp.bfloat16
SCORES_DTYPE = jnp.bfloat16

# Set True (e.g. on v7x, 64 MiB VMEM) to single-buffer the grid-invariant
# matmul RHS via pipeline_mode=pl.Buffered(1); left off by default for broad
# compatibility.  The RHS index map is constant, so double-buffering only
# costs VMEM, never extra DMA.
SINGLE_BUFFER_RESIDENT = False

EMBED_TOKEN_IDS = [VOCAB - NUM_COMPRESS_TOKEN + i for i in range(NUM_COMPRESS_TOKEN)]


def _round_up(x, m):
    return (x + m - 1) // m * m


def _vmem_limit_bytes(k, tq, h, np_pad):
    """Derive the scoped-VMEM request from the actual block shapes."""
    mm_b = np.dtype(MATMUL_INPUT_DTYPE).itemsize
    sc_b = np.dtype(SCORES_DTYPE).itemsize
    pt_bufs = 1 if SINGLE_BUFFER_RESIDENT else 2
    need = (2 * k * tq * h * 4            # q tile, double-buffered, f32
            + pt_bufs * h * np_pad * mm_b  # resident matmul RHS
            + 2 * tq * h * 4               # q_reps tile
            + 2 * tq * np_pad * sc_b       # scores tile
            + 3 * tq * np_pad * 4)         # f32 intermediates (s / exp / masks)
    return int(min(max(2 * need + (4 << 20), 16 << 20), 64 << 20))


# -------------------- fused pool + similarity + CE kernel -------------------
def _fused_kernel(q_ref, pT_ref, *out_refs,
                  nq, np_actual, group_size, inv_temperature,
                  use_cos, normalized, with_loss, mm_dtype):
    """One grid step = one independent tile of query rows ('parallel' axis).

    q_ref  : (K, TQ, H)   compress-token embeddings of this query tile (f32)
    pT_ref : (H, NP_PAD)  pooled (+cos-normalized) passage reps, lane-major, bf16

    outputs: q_reps (TQ, H) f32, scores (TQ, NP_PAD) bf16,
             [per-tile partial CE loss (1,1) SMEM — training only]
    """
    if with_loss:
        q_reps_ref, scores_ref, loss_ref = out_refs
    else:
        q_reps_ref, scores_ref = out_refs

    i = pl.program_id(0)
    k = q_ref.shape[0]
    tq = q_ref.shape[1]

    # ---- pool this query tile over the K compress tokens: static leading-axis
    #      ref slices + VPU adds (no XLU cross-sublane reduce).
    q_pool = q_ref[0].astype(jnp.float32)
    for kk in range(1, k):
        q_pool = q_pool + q_ref[kk].astype(jnp.float32)
    q_pool = q_pool * (1.0 / float(k))                                 # (TQ, H)

    # ---- row norm computed at most once; shared by encode-normalize and cos.
    if normalized or use_cos:
        qn = jnp.sqrt(jnp.sum(q_pool * q_pool, axis=-1, keepdims=True))
        q_unit = q_pool / jnp.maximum(qn, 1e-12)
    q_out = q_unit if normalized else q_pool
    q_reps_ref[...] = q_out.astype(q_reps_ref.dtype)
    q_mm = q_unit if use_cos else q_out

    # ---- similarity on the MXU: (TQ,H) @ (H,NP_PAD), bf16 in, f32 accumulate.
    #      Passage cos norms are already folded into pT by the wrapper, so no
    #      per-tile column-norm work and no transpose on the matmul path.
    s = jax.lax.dot_general(q_mm.astype(mm_dtype), pT_ref[...],
                            (((1,), (0,)), ((), ())),
                            preferred_element_type=jnp.float32)        # (TQ, NP_PAD)
    if inv_temperature != 1.0:                 # training only; eval keeps raw scores
        s = s * inv_temperature
    scores_ref[...] = s.astype(scores_ref.dtype)

    # ---- per-tile partial cross-entropy (training only; eval skips all EUP work).
    if with_loss:
        npad = s.shape[1]
        row_g = i * tq + jax.lax.broadcasted_iota(jnp.int32, (tq, npad), 0)
        col = jax.lax.broadcasted_iota(jnp.int32, (tq, npad), 1)
        col_valid = col < np_actual                    # mask padded passage columns
        s_m = jnp.where(col_valid, s, -1e30)
        row_max = jnp.max(s_m, axis=-1, keepdims=True)
        # TODO(synk): on v6e/v7x feed the exp in bf16 (EUP has bf16 there) once the
        # scores store is the shrunk stream; keep f32 on v5e.
        lse = jnp.log(jnp.sum(jnp.exp(s_m - row_max), axis=-1, keepdims=True)) + row_max
        tgt_mask = jnp.logical_and(col == row_g * group_size, col_valid)
        tgt = jnp.sum(jnp.where(tgt_mask, s, 0.0), axis=-1, keepdims=True)
        row_valid = (i * tq
                     + jax.lax.broadcasted_iota(jnp.int32, (tq, 1), 0)) < nq
        # Per-tile partial sum; mean over nq happens in the wrapper (XLA), so this
        # grid axis carries no cross-tile state and can be 'parallel'.
        loss_ref[0, 0] = jnp.sum(jnp.where(row_valid, lse - tgt, 0.0))


def fused_encode_and_score(q_comp, p_comp, *, group_size, training,
                           temperature=TEMPERATURE, normalized=NORMALIZED,
                           use_cos=(SIM_METHOD == "cos")):
    """q_comp/p_comp: (rows, K, H) compress-token embeddings -> reps/scores/loss."""
    nq, k, h = q_comp.shape
    np_actual = p_comp.shape[0]

    # ---- passage side: one plain-JAX mem-bound pass (grid-invariant work is
    #      hoisted out of the kernel entirely).
    p_pool = jnp.mean(p_comp.astype(jnp.float32), axis=1)              # (Np, H)
    if normalized or use_cos:
        p_unit = p_pool / jnp.maximum(
            jnp.linalg.norm(p_pool, axis=-1, keepdims=True), 1e-12)
    p_reps = p_unit if normalized else p_pool                           # module output
    p_mm = p_unit if use_cos else p_reps                                # matmul RHS rows

    np_pad = _round_up(max(np_actual, 128), 128)                        # lane-dense scores
    # (H, NP_PAD) lane-major RHS, cos norms pre-folded, bf16 for the MXU.
    pT = jnp.zeros((h, np_pad), MATMUL_INPUT_DTYPE).at[:, :np_actual].set(
        p_mm.T.astype(MATMUL_INPUT_DTYPE))

    # ---- query side: K-leading layout so in-kernel pooling is a static
    #      leading-axis slice (avoids a second HBM pass over the q embeddings).
    nq_pad = _round_up(max(nq, 8), 8)
    tq = min(nq_pad, 256)        # raise toward 512 on v5e/v6e (128 MiB VMEM);
                                 # keep 128-256 on v7x (64 MiB per TC).
    nq_pad = _round_up(nq_pad, tq)
    nqt = nq_pad // tq
    q_kf = jnp.zeros((k, nq_pad, h), jnp.float32).at[:, :nq, :].set(
        jnp.transpose(q_comp.astype(jnp.float32), (1, 0, 2)))          # (K, NQ_PAD, H)

    with_loss = bool(training)
    inv_temp = 1.0 / float(temperature) if training else 1.0  # eval: no temperature

    kernel = functools.partial(
        _fused_kernel, nq=nq, np_actual=np_actual, group_size=int(group_size),
        inv_temperature=inv_temp, use_cos=use_cos, normalized=normalized,
        with_loss=with_loss, mm_dtype=MATMUL_INPUT_DTYPE)

    if SINGLE_BUFFER_RESIDENT:
        pT_spec = pl.BlockSpec((h, np_pad), lambda i: (0, 0),
                               pipeline_mode=pl.Buffered(1))
    else:
        pT_spec = pl.BlockSpec((h, np_pad), lambda i: (0, 0))

    out_shape = [jax.ShapeDtypeStruct((nq_pad, h), jnp.float32),       # q_reps
                 jax.ShapeDtypeStruct((nq_pad, np_pad), SCORES_DTYPE)]  # scores
    out_specs = [pl.BlockSpec((tq, h), lambda i: (i, 0)),
                 pl.BlockSpec((tq, np_pad), lambda i: (i, 0))]
    if with_loss:
        out_shape.append(jax.ShapeDtypeStruct((nqt, 1), jnp.float32))   # partial losses
        out_specs.append(pl.BlockSpec((1, 1), lambda i: (i, 0),
                                      memory_space=pltpu.MemorySpace.SMEM))

    # Query-tile grid axis is 'parallel' (no resident accumulators): v7x shards
    # it across its two TensorCores; harmless on single-TC v5e/v6e.
    # TODO(synk): at production Np (resident RHS + scores tile > VMEM budget),
    # add a passage-tile grid axis with an online-LSE accumulator.
    outs = pl.pallas_call(
        kernel,
        grid=(nqt,),
        in_specs=[pl.BlockSpec((k, tq, h), lambda i: (0, i, 0)), pT_spec],
        out_specs=tuple(out_specs),
        out_shape=tuple(out_shape),
        compiler_params=pltpu.CompilerParams(
            dimension_semantics=("parallel",),
            vmem_limit_bytes=_vmem_limit_bytes(k, tq, h, np_pad)),
    )(q_kf, pT)

    if with_loss:
        q_r, s, partial = outs
        loss = jnp.sum(partial) / float(nq)            # CrossEntropyLoss(mean)
    else:
        q_r, s = outs
        loss = None
    return q_r[:nq], p_reps, s[:nq, :np_actual], loss


# ----------------------------- plain-JAX glue -------------------------------
def make_embedding_table(key):
    # deterministic "model" parameters (stand-in for the pretrained LM)
    return jax.random.normal(key, (VOCAB, HIDDEN), dtype=jnp.float32) * 0.05


def _compress(embed_table, input_ids, attention_mask):
    """Mirror of AutoRegEmbed._compress, with a deterministic stand-in encoder."""
    B, S = input_ids.shape
    K = NUM_COMPRESS_TOKEN
    lengths = jnp.sum(attention_mask, axis=1)                        # (B,)

    embedding_ids = jnp.concatenate(
        [input_ids, jnp.full((B, K), PAD_TOKEN_ID, dtype=input_ids.dtype)], axis=1)
    embedding_attention_mask = jnp.concatenate(
        [attention_mask, jnp.zeros((B, K), dtype=attention_mask.dtype)], axis=1)

    insert_indices = lengths[:, None] + jnp.arange(K, dtype=lengths.dtype)[None, :]
    batch_idx = jnp.arange(B)[:, None]
    embed_ids = jnp.broadcast_to(jnp.asarray(EMBED_TOKEN_IDS, dtype=input_ids.dtype),
                                 (B, K))
    embedding_ids = embedding_ids.at[batch_idx, insert_indices].set(embed_ids)
    embedding_attention_mask = embedding_attention_mask.at[batch_idx, insert_indices].set(1)

    # TODO(synk): the pretrained HF AutoModel forward has no Pallas equivalent;
    # stand-in: causal masked-mean of token embeddings + tanh.
    tok_emb = embed_table[embedding_ids]                             # (B, T, H)
    mask_f = embedding_attention_mask.astype(jnp.float32)[..., None]
    csum = jnp.cumsum(tok_emb * mask_f, axis=1)
    ccnt = jnp.cumsum(mask_f, axis=1)
    last_hidden_state = jnp.tanh(csum / jnp.maximum(ccnt, 1.0))      # (B, T, H)

    # torch.gather of hidden states at the embed-token positions.
    # TODO(synk): at scale, fuse this gather into the Pallas kernel via scalar
    # prefetch (insert_indices in SMEM + manual row DMAs) to avoid the (B,K,H)
    # HBM intermediate.
    compress_embedding = last_hidden_state[batch_idx, insert_indices]   # (B, K, H)
    compress_attention_mask = jnp.ones((B, K), dtype=jnp.int32)
    return compress_embedding, compress_attention_mask


def autoregembed_forward(embed_table, query, passage, training=True):
    q_comp, _ = _compress(embed_table, query["input_ids"], query["attention_mask"])
    p_comp, _ = _compress(embed_table, passage["input_ids"], passage["attention_mask"])
    if training:
        # TODO(synk): use_inbatch_neg=False grouped branch and
        # negatives_cross_device all-gather not translated.
        assert USE_INBATCH_NEG
        group_size = p_comp.shape[0] // q_comp.shape[0]
    else:
        group_size = 1
    q_reps, p_reps, scores, loss = fused_encode_and_score(
        q_comp, p_comp, group_size=group_size, training=training)
    # TODO(synk): rank-0 jsonl loss logging not translated.
    return dict(loss=loss, scores=scores, q_reps=q_reps, p_reps=p_reps)


# ------------------------------ reference -----------------------------------
def reference_forward(embed_table, query, passage):
    def enc(f):
        ce, _ = _compress(embed_table, f["input_ids"], f["attention_mask"])
        r = jnp.mean(ce, axis=1)
        if NORMALIZED:
            r = r / jnp.maximum(jnp.linalg.norm(r, axis=-1, keepdims=True), 1e-12)
        return r
    q, p = enc(query), enc(passage)
    qc = q / jnp.maximum(jnp.linalg.norm(q, axis=-1, keepdims=True), 1e-12)
    pc = p / jnp.maximum(jnp.linalg.norm(p, axis=-1, keepdims=True), 1e-12)
    s = (qc @ pc.T) / TEMPERATURE
    gs = p.shape[0] // q.shape[0]
    tgt = jnp.arange(q.shape[0]) * gs
    logp = jax.nn.log_softmax(s, axis=-1)
    loss = -jnp.mean(logp[jnp.arange(q.shape[0]), tgt])
    return s, loss, q, p


# --------------------------------- main --------------------------------------
if __name__ == "__main__":
    key = jax.random.PRNGKey(0)
    k_emb, k_qid, k_qlen, k_pid, k_plen = jax.random.split(key, 5)

    NQ, GROUP = 4, 2
    NP = NQ * GROUP

    embed_table = make_embedding_table(k_emb)

    def make_features(k_id, k_len, n):
        ids = jax.random.randint(k_id, (n, SEQ), 1, VOCAB - NUM_COMPRESS_TOKEN,
                                 dtype=jnp.int32)
        lengths = jax.random.randint(k_len, (n,), 4, SEQ + 1, dtype=jnp.int32)
        mask = (jnp.arange(SEQ)[None, :] < lengths[:, None]).astype(jnp.int32)
        ids = jnp.where(mask == 1, ids, PAD_TOKEN_ID)
        return {"input_ids": ids, "attention_mask": mask}

    query = make_features(k_qid, k_qlen, NQ)
    passage = make_features(k_pid, k_plen, NP)

    # training path (fused pool + cos-sim + CE)
    out = autoregembed_forward(embed_table, query, passage, training=True)
    jax.block_until_ready(out["scores"])
    jax.block_until_ready(out["loss"])

    ref_scores, ref_loss, ref_q, ref_p = reference_forward(embed_table, query, passage)
    # bf16 matmul operands / bf16 scores writeback -> ~1e-2 score tolerance.
    np.testing.assert_allclose(np.asarray(out["q_reps"]), np.asarray(ref_q),
                               atol=1e-4, rtol=1e-4)
    np.testing.assert_allclose(np.asarray(out["p_reps"]), np.asarray(ref_p),
                               atol=1e-4, rtol=1e-4)
    np.testing.assert_allclose(np.asarray(out["scores"].astype(jnp.float32)),
                               np.asarray(ref_scores), atol=2e-2, rtol=2e-2)
    np.testing.assert_allclose(float(out["loss"]), float(ref_loss),
                               atol=2e-2, rtol=2e-2)

    # eval path (no temperature, no CE work inside the kernel)
    out_eval = autoregembed_forward(embed_table, query, passage, training=False)
    jax.block_until_ready(out_eval["scores"])
    assert out_eval["loss"] is None
    np.testing.assert_allclose(np.asarray(out_eval["scores"].astype(jnp.float32)),
                               np.asarray(ref_scores),
                               atol=2e-2, rtol=2e-2)   # TEMPERATURE == 1.0

    print("KERNEL_OK")
</pallas_src>

<mosaic_0001>
module attributes {stable_mosaic.version = 11 : i64} {
  func.func @_fused_kernel(%arg0: i32, %arg1: memref<2x8x128xf32, #tpu.memory_space<vmem>>, %arg2: memref<128x128xbf16, #tpu.memory_space<vmem>>, %arg3: memref<8x128xf32, #tpu.memory_space<vmem>>, %arg4: memref<8x128xbf16, #tpu.memory_space<vmem>>, %arg5: memref<1x1xf32, #tpu.memory_space<smem>>) attributes {dimension_semantics = [#tpu.dimension_semantics<parallel>], iteration_bounds = array<i64: 1>, scalar_prefetch = 0 : i64, scratch_operands = 0 : i64, tpu.core_type = #tpu.core_type<tc>, window_params = [{transform_indices = @transform_0, window_bounds = array<i64: 2, 8, 128>}, {pipeline_mode = #tpu.pipeline_mode<synchronous>, transform_indices = @transform_1, window_bounds = array<i64: 128, 128>}, {transform_indices = @transform_2, window_bounds = array<i64: 8, 128>}, {transform_indices = @transform_3, window_bounds = array<i64: 8, 128>}, {transform_indices = @transform_4, window_bounds = array<i64: 1, 1>}]} {
    %c0 = arith.constant 0 : index
    %c0_0 = arith.constant 0 : index
    %c0_1 = arith.constant 0 : index
    %0 = vector.load %arg1[%c0, %c0_0, %c0_1] : memref<2x8x128xf32, #tpu.memory_space<vmem>>, vector<1x8x128xf32>
    %1 = vector.shape_cast %0 : vector<1x8x128xf32> to vector<8x128xf32>
    %c1 = arith.constant 1 : index
    %c0_2 = arith.constant 0 : index
    %c0_3 = arith.constant 0 : index
    %2 = vector.load %arg1[%c1, %c0_2, %c0_3] : memref<2x8x128xf32, #tpu.memory_space<vmem>>, vector<1x8x128xf32>
    %3 = vector.shape_cast %2 : vector<1x8x128xf32> to vector<8x128xf32>
    %4 = arith.addf %1, %3 : vector<8x128xf32>
    %cst = arith.constant 5.000000e-01 : f32
    %5 = vector.broadcast %cst : f32 to vector<8x128xf32>
    %6 = arith.mulf %4, %5 : vector<8x128xf32>
    %7 = arith.mulf %6, %6 : vector<8x128xf32>
    %cst_4 = arith.constant dense<0.000000e+00> : vector<8xf32>
    %8 = vector.multi_reduction <add>, %7, %cst_4 [1] : vector<8x128xf32> to vector<8xf32>
    %9 = vector.shape_cast %8 : vector<8xf32> to vector<8x1xf32>
    %10 = math.sqrt %9 : vector<8x1xf32>
    %cst_5 = arith.constant 9.99999996E-13 : f32
    %11 = vector.broadcast %cst_5 : f32 to vector<8x1xf32>
    %12 = arith.maximumf %10, %11 : vector<8x1xf32>
    %13 = vector.broadcast %12 : vector<8x1xf32> to vector<8x128xf32>
    %14 = arith.divf %6, %13 : vector<8x128xf32>
    %c0_6 = arith.constant 0 : index
    %c0_7 = arith.constant 0 : index
    %15 = vector.load %arg3[%c0_6, %c0_7] : memref<8x128xf32, #tpu.memory_space<vmem>>, vector<8x128xf32>
    tpu.vector_store %arg3[%c0_6, %c0_7], %6 {strides = array<i32>} : memref<8x128xf32, #tpu.memory_space<vmem>>, vector<8x128xf32>,
    %16 = arith.truncf %14 : vector<8x128xf32> to vector<8x128xbf16>
    %c0_8 = arith.constant 0 : index
    %c0_9 = arith.constant 0 : index
    %17 = vector.load %arg2[%c0_8, %c0_9] : memref<128x128xbf16, #tpu.memory_space<vmem>>, vector<128x128xbf16>
    %cst_10 = arith.constant dense<0.000000e+00> : vector<8x128xf32>
    %18 = tpu.matmul %16, %17, %cst_10 {dimension_numbers = #tpu.dot_dimension_numbers<[1], [0], [0], [1], [0, 0, 1, 1], [], []>} : vector<8x128xbf16>, vector<128x128xbf16>, vector<8x128xf32> -> vector<8x128xf32>
    %19 = arith.truncf %18 : vector<8x128xf32> to vector<8x128xbf16>
    %c0_11 = arith.constant 0 : index
    %c0_12 = arith.constant 0 : index
    %20 = vector.load %arg4[%c0_11, %c0_12] : memref<8x128xbf16, #tpu.memory_space<vmem>>, vector<8x128xbf16>
    tpu.vector_store %arg4[%c0_11, %c0_12], %19 {strides = array<i32>} : memref<8x128xbf16, #tpu.memory_space<vmem>>, vector<8x128xbf16>,
    %c8_i32 = arith.constant 8 : i32
    %21 = arith.muli %arg0, %c8_i32 : i32
    %22 = tpu.iota {dimensions = array<i32: 0>} : vector<8x128xi32>
    %23 = vector.broadcast %21 : i32 to vector<8x128xi32>
    %24 = arith.addi %23, %22 : vector<8x128xi32>
    %25 = tpu.iota {dimensions = array<i32: 1>} : vector<8x128xi32>
    %c8_i32_13 = arith.constant 8 : i32
    %26 = vector.broadcast %c8_i32_13 : i32 to vector<8x128xi32>
    %27 = arith.cmpi slt, %25, %26 : vector<8x128xi32>
    %cst_14 = arith.constant -1.000000e+30 : f32
    %28 = vector.broadcast %cst_14 : f32 to vector<8x128xf32>
    %29 = arith.select %27, %18, %28 : vector<8x128xi1>, vector<8x128xf32>
    %cst_15 = arith.constant dense<0xFF800000> : vector<8xf32>
    %30 = vector.multi_reduction <maximumf>, %29, %cst_15 [1] : vector<8x128xf32> to vector<8xf32>
    %31 = vector.shape_cast %30 : vector<8xf32> to vector<8x1xf32>
    %32 = vector.broadcast %31 : vector<8x1xf32> to vector<8x128xf32>
    %33 = arith.subf %29, %32 : vector<8x128xf32>
    %34 = math.exp %33 : vector<8x128xf32>
    %cst_16 = arith.constant dense<0.000000e+00> : vector<8xf32>
    %35 = vector.multi_reduction <add>, %34, %cst_16 [1] : vector<8x128xf32> to vector<8xf32>
    %36 = vector.shape_cast %35 : vector<8xf32> to vector<8x1xf32>
    %37 = math.log %36 : vector<8x1xf32>
    %38 = arith.addf %37, %31 : vector<8x1xf32>
    %c2_i32 = arith.constant 2 : i32
    %39 = vector.broadcast %c2_i32 : i32 to vector<8x128xi32>
    %40 = arith.muli %24, %39 : vector<8x128xi32>
    %41 = arith.cmpi eq, %25, %40 : vector<8x128xi32>
    %42 = arith.andi %41, %27 : vector<8x128xi1>
    %cst_17 = arith.constant 0.000000e+00 : f32
    %43 = vector.broadcast %cst_17 : f32 to vector<8x128xf32>
    %44 = arith.select %42, %18, %43 : vector<8x128xi1>, vector<8x128xf32>
    %cst_18 = arith.constant dense<0.000000e+00> : vector<8xf32>
    %45 = vector.multi_reduction <add>, %44, %cst_18 [1] : vector<8x128xf32> to vector<8xf32>
    %46 = vector.shape_cast %45 : vector<8xf32> to vector<8x1xf32>
    %c8_i32_19 = arith.constant 8 : i32
    %47 = arith.muli %arg0, %c8_i32_19 : i32
    %48 = tpu.iota {dimensions = array<i32: 0>} : vector<8x1xi32>
    %49 = vector.broadcast %47 : i32 to vector<8x1xi32>
    %50 = arith.addi %49, %48 : vector<8x1xi32>
    %c4_i32 = arith.constant 4 : i32
    %51 = vector.broadcast %c4_i32 : i32 to vector<8x1xi32>
    %52 = arith.cmpi slt, %50, %51 : vector<8x1xi32>
    %53 = arith.subf %38, %46 : vector<8x1xf32>
    %cst_20 = arith.constant 0.000000e+00 : f32
    %54 = vector.broadcast %cst_20 : f32 to vector<8x1xf32>
    %55 = arith.select %52, %53, %54 : vector<8x1xi1>, vector<8x1xf32>
    %56 = vector.shape_cast %55 : vector<8x1xf32> to vector<1x8x1xf32>
    %cst_21 = arith.constant dense<0.000000e+00> : vector<1xf32>
    %57 = vector.multi_reduction <add>, %56, %cst_21 [1, 2] : vector<1x8x1xf32> to vector<1xf32>
    %58 = vector.shape_cast %57 : vector<1xf32> to vector<1x1x1xf32>
    %59 = vector.extract %58[0, 0, 0] : f32 from vector<1x1x1xf32>
    %c0_22 = arith.constant 0 : index
    %c0_23 = arith.constant 0 : index
    %60 = memref.load %arg5[%c0_22, %c0_23] : memref<1x1xf32, #tpu.memory_space<smem>>
    memref.store %59, %arg5[%c0_22, %c0_23] : memref<1x1xf32, #tpu.memory_space<smem>>
    return
  }
  func.func @transform_0(%arg0: i32) -> (i32, i32, i32) {
    %c0_i32 = arith.constant 0 : i32
    %c0_i32_0 = arith.constant 0 : i32
    %c0_i32_1 = arith.constant 0 : i32
    return %c0_i32, %arg0, %c0_i32_0 : i32, i32, i32
  }
  func.func @transform_1(%arg0: i32) -> (i32, i32) {
    %c0_i32 = arith.constant 0 : i32
    %c0_i32_0 = arith.constant 0 : i32
    %c0_i32_1 = arith.constant 0 : i32
    return %c0_i32, %c0_i32_0 : i32, i32
  }
  func.func @transform_2(%arg0: i32) -> (i32, i32) {
    %c0_i32 = arith.constant 0 : i32
    %c0_i32_0 = arith.constant 0 : i32
    return %arg0, %c0_i32 : i32, i32
  }
  func.func @transform_3(%arg0: i32) -> (i32, i32) {
    %c0_i32 = arith.constant 0 : i32
    %c0_i32_0 = arith.constant 0 : i32
    return %arg0, %c0_i32 : i32, i32
  }
  func.func @transform_4(%arg0: i32) -> (i32, i32) {
    %c0_i32 = arith.constant 0 : i32
    %c0_i32_0 = arith.constant 0 : i32
    return %arg0, %c0_i32 : i32, i32
  }
}

</mosaic_0001>

<llo_original>
// kernel: tpu_custom_call.1
$region0: #{tpu_custom_call.1}
  #allocation0 [shape = 'u32[]', space=smem, size = 0x4, offset = 0x4, fixed_abs, tag = 'smem constant byte address 0x4 - core index']
  #allocation1 [shape = 'u32[144,128]{1,0:T(1,128)}', space=vmem, size = 0x12000, scoped, tag = 'internal scratch']
  %s0 = inlined_call_operand.hbm [shape: f32[2,8,128], index: 0, kind: input, shape index: {}]
  %s1 = inlined_call_operand.hbm [shape: bf16[128,128], index: 1, kind: input, shape index: {}]
  %s2 = inlined_call_operand.hbm [shape: f32[8,128], index: 2, kind: output, shape index: {0}]
  %s3 = inlined_call_operand.hbm [shape: bf16[8,128], index: 3, kind: output, shape index: {1}]
  %s4 = inlined_call_operand.hbm [shape: f32[1,1], index: 4, kind: output, shape index: {2}]
  %5 = xla_tuple %s2, %s3, %s4
  %s6 = sld [smem:[#allocation0]]
  $region42: #{tpu_custom_call.1} parent=0
    _
  %s8 = ssub.s32 1, %s6
  %s9 = scalar_select 0, %s8, %s6
  $region1: #{tpu_custom_call.1} parent=0
    #allocation2 [shape = 'u8[8192]{0}', space=vmem, size = 0x2000, scoped, tag = 'input window, operand 0, single buffered']
    #allocation3 [shape = 's32[1]{0}', space=sflag, size = 0x4, scoped, tag = 'scoped memory for tpu_custom_call.1']
    #allocation4 [shape = 's32[1]{0}', space=sflag, size = 0x4, scoped, tag = 'scoped memory for tpu_custom_call.1']
    #allocation5 [shape = 's32[1]{0}', space=sflag, size = 0x4, scoped, tag = 'scoped memory for tpu_custom_call.1']
    #allocation6 [shape = 'u8[32768]{0}', space=vmem, size = 0x8000, scoped, tag = 'input window, operand 1, single buffered']
    #allocation7 [shape = 's32[1]{0}', space=sflag, size = 0x4, scoped, tag = 'scoped memory for tpu_custom_call.1']
    #allocation8 [shape = 'u8[4096]{0}', space=vmem, size = 0x1000, scoped, tag = 'output window, operand 0, single buffered']
    #allocation9 [shape = 'u8[2048]{0}', space=vmem, size = 0x800, scoped, tag = 'output window, operand 1, single buffered']
    #allocation10 [shape = 's32[1]{0}', space=sflag, size = 0x4, scoped, tag = 'scoped memory for tpu_custom_call.1']
    #allocation11 [shape = 'u8[512]{0}', space=smem, size = 0x200, scoped, tag = 'output window, operand 2, single buffered']
    %10 = vsyncpa [#allocation3], 0
    %11 = vsyncpa [#allocation7], 0
    %12 = vsyncpa [#allocation4], 0
    %13 = vsyncpa [#allocation10], 0
    %14 = vsyncpa [#allocation5], 0
    // Predicated region
    $region2: #{tpu_custom_call.1} parent=1 // pred_check
      _
    $region3: #{tpu_custom_call.1} parent=1 // pred_check_branch
      %16 = sbr.rel (0) target = $region5
    $region4: #{tpu_custom_call.1} parent=1 // pred_region
      %s18 = ssub.s32 256, 256
      %19 = vsyncadd [#allocation3], %s18
      %s20 = sshll.u32 [#allocation2], 4
      %s21 = int_to_ptr.vmem [resolvable:$true] %s20
      %26 = dma.hbm_to_vmem [thread:$0]  %s0, 256, %s21, [#allocation3], 128, 128, 8
    $region5: #{tpu_custom_call.1} parent=1 // pred_fallthru
      _
    // Predicated region
    $region6: #{tpu_custom_call.1} parent=1 // pred_check
      _
    $region7: #{tpu_custom_call.1} parent=1 // pred_check_branch
      %28 = sbr.rel (0) target = $region9
    $region8: #{tpu_custom_call.1} parent=1 // pred_region
      %s30 = ssub.s32 1024, 1024
      %31 = vsyncadd [#allocation7], %s30
      %s32 = sshll.u32 [#allocation6], 4
      %s33 = int_to_ptr.vmem [resolvable:$true] %s32
      %38 = dma.hbm_to_vmem [thread:$0]  %s1, 1024, %s33, [#allocation7], 64, 64, 4
    $region9: #{tpu_custom_call.1} parent=1 // pred_fallthru
      _
    // Predicated region
    $region10: #{tpu_custom_call.1} parent=1 // pred_check
      _
    $region11: #{tpu_custom_call.1} parent=1 // pred_check_branch
      %40 = sbr.rel (0) target = $region13
    $region12: #{tpu_custom_call.1} parent=1 // pred_region
      %41 = dma.done [#allocation3], 256
    $region13: #{tpu_custom_call.1} parent=1 // pred_fallthru
      _
    // Predicated region
    $region14: #{tpu_custom_call.1} parent=1 // pred_check
      _
    $region15: #{tpu_custom_call.1} parent=1 // pred_check_branch
      %43 = sbr.rel (0) target = $region17
    $region16: #{tpu_custom_call.1} parent=1 // pred_region
      %44 = dma.done [#allocation7], 1024
    $region17: #{tpu_custom_call.1} parent=1 // pred_fallthru
      _
    %v46 = vld [vmem:[#allocation2] sm:$0xff]
    %s47 = scalar_lea.vmem [#allocation2], 8
    %v48 = vld [vmem:[%s47] sm:$0xff]
    %v49 = vadd.f32 %v46, %v48
    %v50 = vmul.f32 %v49, 0.5
    %v51 = vmul.f32 %v50, %v50
    %52 = vadd.xlane.f32.xlu0 %v51
    %v53 = vpop.xlane.xlu0 %52
    %v54 = vrsqrt.pop %v53
    %v55 = vmul.f32 %v53, %v54
    %vm56 = vcmp.eq.f32.partialorder %v53, inf
    %v57 = vsel %vm56, %v53, %v55
    %vm58 = vcmp.eq.f32.partialorder %v53, 0.0
    %v59 = vand.u32 %v53, 2147483648
    %v60 = vsel %vm58, %v59, %v57
    %v61 = vmax.f32 %v60, 1e-12
    %v62 = vrcp.pop %v61
    %v63 = vmul.f32 %v50, %v62
    %64 = vst [vmem:[#allocation8] sm:$0xff] %v50
    %v65 = vpack.c.bf16 %v63, %v63
    %v66 = vld [vmem:[#allocation6] sm:$0xf]
    %v67 = vld [vmem:[#allocation6 + $0x4] sm:$0xf]
    %v68 = vld [vmem:[#allocation6 + $0x8] sm:$0xf]
    %v69 = vld [vmem:[#allocation6 + $0xc] sm:$0xf]
    %v70 = vld [vmem:[#allocation6 + $0x10] sm:$0xf]
    %v71 = vld [vmem:[#allocation6 + $0x14] sm:$0xf]
    %v72 = vld [vmem:[#allocation6 + $0x18] sm:$0xf]
    %v73 = vld [vmem:[#allocation6 + $0x1c] sm:$0xf]
    %v74 = vld [vmem:[#allocation6 + $0x20] sm:$0xf]
    %v75 = vld [vmem:[#allocation6 + $0x24] sm:$0xf]
    %v76 = vld [vmem:[#allocation6 + $0x28] sm:$0xf]
    %v77 = vld [vmem:[#allocation6 + $0x2c] sm:$0xf]
    %v78 = vld [vmem:[#allocation6 + $0x30] sm:$0xf]
    %v79 = vld [vmem:[#allocation6 + $0x34] sm:$0xf]
    %v80 = vld [vmem:[#allocation6 + $0x38] sm:$0xf]
    %v81 = vld [vmem:[#allocation6 + $0x3c] sm:$0xf]
    %v98 = vunpack.c.l.b16 %v66
    %v99 = vunpack.c.l.b16 %v67
    %v100 = vunpack.c.l.b16 %v68
    %v101 = vunpack.c.l.b16 %v69
    %v102 = vunpack.c.l.b16 %v70
    %v103 = vunpack.c.l.b16 %v71
    %v104 = vunpack.c.l.b16 %v72
    %v105 = vunpack.c.l.b16 %v73
    %v106 = vunpack.c.l.b16 %v74
    %v107 = vunpack.c.l.b16 %v75
    %v108 = vunpack.c.l.b16 %v76
    %v109 = vunpack.c.l.b16 %v77
    %v110 = vunpack.c.l.b16 %v78
    %v111 = vunpack.c.l.b16 %v79
    %v112 = vunpack.c.l.b16 %v80
    %v113 = vunpack.c.l.b16 %v81
    %v114 = vpack.c.b16 %v99, %v98
    %v115 = vpack.c.b16 %v101, %v100
    %v116 = vpack.c.b16 %v103, %v102
    %v117 = vpack.c.b16 %v105, %v104
    %v118 = vpack.c.b16 %v107, %v106
    %v119 = vpack.c.b16 %v109, %v108
    %v120 = vpack.c.b16 %v111, %v110
    %v121 = vpack.c.b16 %v113, %v112
    %130 = vmatprep.subr.bf16.mxu0 0
    %131 = vmatpush1.bf16.msra.mxu0 %v121
    %132 = vmatprep.subr.bf16.mxu0 0
    %133 = vmatpush1.bf16.msra.mxu0 %v120
    %134 = vmatprep.subr.bf16.mxu0 0
    %135 = vmatpush1.bf16.msra.mxu0 %v119
    %136 = vmatprep.subr.bf16.mxu0 0
    %137 = vmatpush1.bf16.msra.mxu0 %v118
    %138 = vmatprep.subr.bf16.mxu0 0
    %139 = vmatpush1.bf16.msra.mxu0 %v117
    %140 = vmatprep.subr.bf16.mxu0 0
    %141 = vmatpush1.bf16.msra.mxu0 %v116
    %142 = vmatprep.subr.bf16.mxu0 0
    %143 = vmatpush1.bf16.msra.mxu0 %v115
    %144 = vmatprep.subr.bf16.mxu0 0
    %145 = vmatpush1.bf16.msra.mxu0 %v114
    %146 = vmatprep.subr.bf16.mxu0 0
    %147 = vmatpush2.bf16.msra.mxu0 0
    %148 = vmatprep.subr.bf16.mxu0 0
    %149 = vmatpush2.bf16.msra.mxu0 0
    %150 = vmatprep.subr.bf16.mxu0 0
    %151 = vmatpush2.bf16.msra.mxu0 0
    %152 = vmatprep.subr.bf16.mxu0 0
    %153 = vmatpush2.bf16.msra.mxu0 0
    %154 = vmatprep.subr.bf16.mxu0 0
    %155 = vmatpush2.bf16.msra.mxu0 0
    %156 = vmatprep.subr.bf16.mxu0 0
    %157 = vmatpush2.bf16.msra.mxu0 0
    %158 = vmatprep.subr.bf16.mxu0 0
    %159 = vmatpush2.bf16.msra.mxu0 0
    %160 = vmatprep.subr.bf16.mxu0 0
    %161 = vmatpush2.bf16.msra.mxu0 0
    %162 = vmatprep.mubr.bf16.mxu0 0
    %163 = vmatmul.mubr.bf16.gmra.mxu0 %v65
    %v164 = vpop.f32.mrf.mxu0
    %v165 = vadd.f32 0.0, %v164
    %v166 = vpop.f32.mrf.mxu0
    %v167 = vpop.f32.mrf.mxu0
    %v168 = vpop.f32.mrf.mxu0
    %169 = vdwg.mxu0
    %v170 = vpack.c.bf16 %v165, %v165
    %171 = vst [vmem:[#allocation9] sm:$0xf] %v170
    %s172 = smul.u32 0, 8
    %v173 = vlaneseq
    %v174 = vshrl.u32 %v173, 7
    %v175 = vstv %s172
    %v176 = vadd.s32 %v175, %v174
    %v177 = vlaneseq
    %v178 = vand.u32 %v177, 127
    %vm179 = vcmp.lt.s32.totalorder %v178, 8
    %v180 = vsel %vm179, %v165, -1e+30
    %181 = vmax.xlane.f32.xlu0 %v180
    %v182 = vpop.xlane.xlu0 %181
    %v183 = vsub.f32 %v180, %v182
    %v184 = vmul.f32 %v183, 1.442695
    %v185 = vpow.pop %v184
    %186 = vadd.xlane.f32.xlu0 %v185
    %v187 = vpop.xlane.xlu0 %186
    %v188 = vlog2.pop %v187
    %v189 = vmul.f32 %v188, 0.6931472
    %v190 = vadd.f32 %v189, %v182
    %v191 = vmul.u32 %v176, 2
    %vm192 = vcmp.eq.s32.totalorder %v178, %v191
    %vm193 = vmand %vm192, %vm179
    %v194 = vsel %vm193, %v165, 0.0
    %195 = vadd.xlane.f32.xlu0 %v194
    %v196 = vpop.xlane.xlu0 %195
    %vm197 = vcmp.lt.s32.totalorder %v176, 4
    %v198 = vsub.f32 %v190, %v196
    %v199 = vsel %vm197, %v198, 0.0
    %vm200 = vcmask 7168
    %v201 = vsel %vm200, %v199, 0.0
    %202 = vadd.xlane.f32.xlu0 %v201
    %v203 = vpop.xlane.xlu0 %202
    %v204 = vrot.slane %v203, 4
    %v205 = vadd.f32 %v203, %v204
    %v206 = vrot.slane %v205, 2
    %v207 = vadd.f32 %v205, %v206
    %v208 = vrot.slane %v207, 1
    %v209 = vadd.f32 %v207, %v208
    %s210 = vtos %v209
    %s211 = scalar_lea.smem [#allocation11], 0
    %212 = sst [smem:[%s211]] %s210
    // Predicated region
    $region18: #{tpu_custom_call.1} parent=1 // pred_check
      _
    $region19: #{tpu_custom_call.1} parent=1 // pred_check_branch
      %214 = sbr.rel (0) target = $region21
    $region20: #{tpu_custom_call.1} parent=1 // pred_region
      %s216 = ssub.s32 128, 128
      %217 = vsyncadd [#allocation4], %s216
      %s219 = sshll.u32 [#allocation8], 4
      %s220 = int_to_ptr.vmem [resolvable:$true] %s219
      %222 = dma.vmem_to_hbm [thread:$0]  %s220, 128, %s2, [#allocation4]
    $region21: #{tpu_custom_call.1} parent=1 // pred_fallthru
      _
    // Predicated region
    $region22: #{tpu_custom_call.1} parent=1 // pred_check
      _
    $region23: #{tpu_custom_call.1} parent=1 // pred_check_branch
      %224 = sbr.rel (0) target = $region25
    $region24: #{tpu_custom_call.1} parent=1 // pred_region
      %s226 = ssub.s32 64, 64
      %227 = vsyncadd [#allocation10], %s226
      %s229 = sshll.u32 [#allocation9], 4
      %s230 = int_to_ptr.vmem [resolvable:$true] %s229
      %232 = dma.vmem_to_hbm [thread:$0]  %s230, 64, %s3, [#allocation10]
    $region25: #{tpu_custom_call.1} parent=1 // pred_fallthru
      _
    // Predicated region
    $region26: #{tpu_custom_call.1} parent=1 // pred_check
      _
    $region27: #{tpu_custom_call.1} parent=1 // pred_check_branch
      %234 = sbr.rel (0) target = $region29
    $region28: #{tpu_custom_call.1} parent=1 // pred_region
      %s236 = ssub.s32 16, 16
      %237 = vsyncadd [#allocation5], %s236
      %240 = dma.smem_to_hbm [#allocation11], 16, %s4, [#allocation5]
    $region29: #{tpu_custom_call.1} parent=1 // pred_fallthru
      _
    // Predicated region
    $region30: #{tpu_custom_call.1} parent=1 // pred_check
      _
    $region31: #{tpu_custom_call.1} parent=1 // pred_check_branch
      %242 = sbr.rel (0) target = $region33
    $region32: #{tpu_custom_call.1} parent=1 // pred_region
      %243 = dma.done [#allocation4], 128
    $region33: #{tpu_custom_call.1} parent=1 // pred_fallthru
      _
    // Predicated region
    $region34: #{tpu_custom_call.1} parent=1 // pred_check
      _
    $region35: #{tpu_custom_call.1} parent=1 // pred_check_branch
      %245 = sbr.rel (0) target = $region37
    $region36: #{tpu_custom_call.1} parent=1 // pred_region
      %246 = dma.done [#allocation10], 64
    $region37: #{tpu_custom_call.1} parent=1 // pred_fallthru
      _
    // Predicated region
    $region38: #{tpu_custom_call.1} parent=1 // pred_check
      _
    $region39: #{tpu_custom_call.1} parent=1 // pred_check_branch
      %248 = sbr.rel (0) target = $region41
    $region40: #{tpu_custom_call.1} parent=1 // pred_region
      %249 = dma.done [#allocation5], 16
    $region41: #{tpu_custom_call.1} parent=1 // pred_fallthru
      _
    %250 = sfence
    %251 = vsyncpa [#allocation3], 1
    %252 = vsyncpa [#allocation7], 1
    %253 = vsyncpa [#allocation4], 1
    %254 = vsyncpa [#allocation10], 1
    %255 = vsyncpa [#allocation5], 1

</llo_original>
